<compile_context>
chip_gen: v6e
topology: v6e:2x2x1
jax: 0.10.0
libtpu: 0.0.40
codegen_flags: <defaults>
</compile_context>

<pallas_src>
import functools

import jax
import jax.numpy as jnp
from jax.experimental import pallas as pl
from jax.experimental.pallas import tpu as pltpu

NUM_ENSEMBLE = 5


def _round_up(x, m):
    return ((x + m - 1) // m) * m


def _ensemble_mlp_kernel(x_ref, s1_ref, s2_ref, o_ref, *, din, eh):
    # x_ref : (B, Din)
    # s1_ref: (Din+1, E*H)   rows [0:Din] = W1_packed, row [Din] = b1
    # s2_ref: (E*H+1, Pout)  rows [0:E*H] = W2_blockdiag, row [E*H] = b2
    # o_ref : (B, Pout)      Pout = E*Dout padded to a multiple of 128
    x = x_ref[...]
    w1 = s1_ref[:din, :]
    b1 = s1_ref[din:din + 1, :]
    h = jnp.dot(x, w1, preferred_element_type=jnp.float32) + b1
    h = jnp.maximum(h, 0.0)
    w2 = s2_ref[:eh, :]
    b2 = s2_ref[eh:eh + 1, :]
    o_ref[...] = jnp.dot(h, w2, preferred_element_type=jnp.float32) + b2


@functools.partial(jax.jit, static_argnames=("ids", "output_dim"))
def _ensemble_predict(x, slab1, slab2, *, ids, output_dim):
    """Single fused program: Pallas kernel + static member selection.

    x     : (B, Din)
    slab1 : (Din+1, E*H)
    slab2 : (E*H+1, Pout)
    ids   : static tuple of member indices
    returns (B, Dout) if len(ids) == 1 else (len(ids), B, Dout)
    """
    B, din = x.shape
    eh = slab1.shape[1]
    pout = slab2.shape[1]

    out = pl.pallas_call(
        functools.partial(_ensemble_mlp_kernel, din=din, eh=eh),
        out_shape=jax.ShapeDtypeStruct((B, pout), jnp.float32),
        in_specs=[
            pl.BlockSpec(memory_space=pltpu.MemorySpace.VMEM),
            pl.BlockSpec(memory_space=pltpu.MemorySpace.VMEM),
            pl.BlockSpec(memory_space=pltpu.MemorySpace.VMEM),
        ],
        out_specs=pl.BlockSpec(memory_space=pltpu.MemorySpace.VMEM),
    )(x, slab1, slab2)

    # Static, lane-contiguous column blocks — no reshape/transpose copy.
    preds = [out[:, m * output_dim:(m + 1) * output_dim] for m in ids]
    if len(preds) == 1:
        return preds[0]
    return jnp.stack(preds)


class StochasticWrapperPallas:
    """JAX/Pallas port of stochastic_wrapper(wrapper_mode='ensemble')."""

    def __init__(self, input_dim, output_dim, hidden_dim, key):
        self.num_ensemble = NUM_ENSEMBLE
        self.output_dim = output_dim
        self.sample_id = 0

        E = self.num_ensemble
        k1, k2, k3, k4 = jax.random.split(key, 4)
        # Deterministic synthetic params (not a checkpoint load).
        s1 = 1.0 / jnp.sqrt(jnp.float32(input_dim))
        s2 = 1.0 / jnp.sqrt(jnp.float32(hidden_dim))
        self.W1 = jax.random.uniform(k1, (E, input_dim, hidden_dim),
                                     jnp.float32, -s1, s1)
        self.B1 = jax.random.uniform(k2, (E, 1, hidden_dim),
                                     jnp.float32, -s1, s1)
        self.W2 = jax.random.uniform(k3, (E, hidden_dim, output_dim),
                                     jnp.float32, -s2, s2)
        self.B2 = jax.random.uniform(k4, (E, 1, output_dim),
                                     jnp.float32, -s2, s2)

        # ---- one-time packing into lane-dense kernel slabs ------------------
        EH = E * hidden_dim
        EO = E * output_dim
        Pout = _round_up(EO, 128)

        # (E, Din, H) -> (Din, E*H), member-major column blocks; bias as extra row.
        W1p = jnp.transpose(self.W1, (1, 0, 2)).reshape(input_dim, EH)
        b1p = self.B1.reshape(1, EH)
        self.slab1 = jnp.concatenate([W1p, b1p], axis=0)          # (Din+1, E*H)

        # Block-diagonal (E*H, E*Dout), zero-padded on the lane dim to Pout;
        # bias as extra row.
        W2bd = jax.scipy.linalg.block_diag(*[self.W2[m] for m in range(E)])
        W2bd = jnp.pad(W2bd, ((0, 0), (0, Pout - EO)))
        b2p = jnp.pad(self.B2.reshape(1, EO), ((0, 0), (0, Pout - EO)))
        self.slab2 = jnp.concatenate([W2bd, b2p], axis=0)          # (E*H+1, Pout)

    # ---- torch-compatible API -----------------------------------------------
    def sample(self):
        self.sample_id = (self.sample_id + 1) % self.num_ensemble

    def kl_divergence(self):
        return 0  # ensemble mode

    def forward(self, x):
        return _ensemble_predict(x, self.slab1, self.slab2,
                                 ids=(self.sample_id,),
                                 output_dim=self.output_dim)

    def forward_multiple(self, x, n_prediction=5):
        # torch semantics: sample() is called BEFORE each forward.
        ids = tuple((self.sample_id + i + 1) % self.num_ensemble
                    for i in range(n_prediction))
        self.sample_id = ids[-1]
        return _ensemble_predict(x, self.slab1, self.slab2,
                                 ids=ids, output_dim=self.output_dim)


def _reference(mids, x, W1, B1, W2, B2):
    outs = []
    for m in mids:
        h = jnp.maximum(x @ W1[m] + B1[m], 0.0)
        outs.append(h @ W2[m] + B2[m])
    return jnp.stack(outs)


if __name__ == "__main__":
    key = jax.random.PRNGKey(0)
    kp, kx = jax.random.split(key)

    batch, input_dim, hidden_dim, output_dim = 8, 32, 32, 8
    model = StochasticWrapperPallas(input_dim, output_dim, hidden_dim, kp)
    x = jax.random.normal(kx, (batch, input_dim), jnp.float32)

    # single forward (current sample_id = 0)
    y0 = model.forward(x)
    # forward_multiple: 5 stacked predictions, cycling ensemble members
    ys = model.forward_multiple(x, n_prediction=5)
    jax.block_until_ready((y0, ys))

    # silent correctness check vs pure-JAX reference
    ref0 = _reference([0], x, model.W1, model.B1, model.W2, model.B2)[0]
    refm = _reference([1, 2, 3, 4, 0], x, model.W1, model.B1, model.W2, model.B2)
    assert jnp.allclose(y0, ref0, atol=1e-5), "single forward mismatch"
    assert jnp.allclose(ys, refm, atol=1e-5), "forward_multiple mismatch"
    assert ys.shape == (5, batch, output_dim)

    print("KERNEL_OK")
</pallas_src>

<mosaic_0001>
module attributes {stable_mosaic.version = 11 : i64} {
  func.func @_ensemble_mlp_kernel(%arg0: memref<8x32xf32, #tpu.memory_space<vmem>>, %arg1: memref<33x160xf32, #tpu.memory_space<vmem>>, %arg2: memref<161x128xf32, #tpu.memory_space<vmem>>, %arg3: memref<8x128xf32, #tpu.memory_space<vmem>>) attributes {dimension_semantics = [], scalar_prefetch = 0 : i64, scratch_operands = 0 : i64, tpu.core_type = #tpu.core_type<tc>} {
    %c0 = arith.constant 0 : index
    %c0_0 = arith.constant 0 : index
    %0 = vector.load %arg0[%c0, %c0_0] : memref<8x32xf32, #tpu.memory_space<vmem>>, vector<8x32xf32>
    %c0_1 = arith.constant 0 : index
    %c0_2 = arith.constant 0 : index
    %1 = vector.load %arg1[%c0_1, %c0_2] : memref<33x160xf32, #tpu.memory_space<vmem>>, vector<32x160xf32>
    %c32 = arith.constant 32 : index
    %c0_3 = arith.constant 0 : index
    %2 = vector.load %arg1[%c32, %c0_3] : memref<33x160xf32, #tpu.memory_space<vmem>>, vector<1x160xf32>
    %cst = arith.constant dense<0.000000e+00> : vector<8x160xf32>
    %3 = tpu.matmul %0, %1, %cst {dimension_numbers = #tpu.dot_dimension_numbers<[1], [0], [0], [1], [0, 0, 1, 1], [], []>} : vector<8x32xf32>, vector<32x160xf32>, vector<8x160xf32> -> vector<8x160xf32>
    %4 = vector.broadcast %2 : vector<1x160xf32> to vector<8x160xf32>
    %5 = arith.addf %3, %4 : vector<8x160xf32>
    %cst_4 = arith.constant 0.000000e+00 : f32
    %6 = vector.broadcast %cst_4 : f32 to vector<8x160xf32>
    %7 = arith.maximumf %5, %6 : vector<8x160xf32>
    %c0_5 = arith.constant 0 : index
    %c0_6 = arith.constant 0 : index
    %8 = vector.load %arg2[%c0_5, %c0_6] : memref<161x128xf32, #tpu.memory_space<vmem>>, vector<160x128xf32>
    %c160 = arith.constant 160 : index
    %c0_7 = arith.constant 0 : index
    %9 = vector.load %arg2[%c160, %c0_7] : memref<161x128xf32, #tpu.memory_space<vmem>>, vector<1x128xf32>
    %cst_8 = arith.constant dense<0.000000e+00> : vector<8x128xf32>
    %10 = tpu.matmul %7, %8, %cst_8 {dimension_numbers = #tpu.dot_dimension_numbers<[1], [0], [0], [1], [0, 0, 1, 1], [], []>} : vector<8x160xf32>, vector<160x128xf32>, vector<8x128xf32> -> vector<8x128xf32>
    %11 = vector.broadcast %9 : vector<1x128xf32> to vector<8x128xf32>
    %12 = arith.addf %10, %11 : vector<8x128xf32>
    %c0_9 = arith.constant 0 : index
    %c0_10 = arith.constant 0 : index
    %13 = vector.load %arg3[%c0_9, %c0_10] : memref<8x128xf32, #tpu.memory_space<vmem>>, vector<8x128xf32>
    tpu.vector_store %arg3[%c0_9, %c0_10], %12 {strides = array<i32>} : memref<8x128xf32, #tpu.memory_space<vmem>>, vector<8x128xf32>,
    return
  }
}

</mosaic_0001>

<llo_original>
// kernel: _ensemble_predict.1
$region0: #{_ensemble_predict.1}
  #allocation0 [shape = 'u32[]', space=smem, size = 0x4, offset = 0x4, fixed_abs, tag = 'smem constant byte address 0x4 - core index']
  #allocation1 [shape = 'u32[144,128]{1,0:T(1,128)}', space=vmem, size = 0x12000, scoped, tag = 'internal scratch']
  %s0 = inlined_call_operand.hbm [shape: f32[8,32], index: 0, kind: input, shape index: {}]
  %s1 = inlined_call_operand.hbm [shape: f32[33,160], index: 1, kind: input, shape index: {}]
  %s2 = inlined_call_operand.hbm [shape: f32[161,128], index: 2, kind: input, shape index: {}]
  %s3 = inlined_call_operand.hbm [shape: f32[8,128], index: 3, kind: output, shape index: {}]
  %s4 = sld [smem:[#allocation0]]
  $region34: #{_ensemble_predict.1} parent=0
    _
  %s6 = ssub.s32 1, %s4
  %s7 = scalar_select 0, %s6, %s4
  $region1: #{_ensemble_predict.1} parent=0
    #allocation2 [shape = 'u8[4096]{0}', space=vmem, size = 0x1000, scoped, tag = 'input window, operand 0, single buffered']
    #allocation3 [shape = 's32[1]{0}', space=sflag, size = 0x4, scoped, tag = 'scoped memory for _ensemble_predict.1']
    #allocation4 [shape = 's32[1]{0}', space=sflag, size = 0x4, scoped, tag = 'scoped memory for _ensemble_predict.1']
    #allocation5 [shape = 'u8[40960]{0}', space=vmem, size = 0xa000, scoped, tag = 'input window, operand 1, single buffered']
    #allocation6 [shape = 's32[1]{0}', space=sflag, size = 0x4, scoped, tag = 'scoped memory for _ensemble_predict.1']
    #allocation7 [shape = 'u8[86016]{0}', space=vmem, size = 0x15000, scoped, tag = 'input window, operand 2, single buffered']
    #allocation8 [shape = 'u8[4096]{0}', space=vmem, size = 0x1000, scoped, tag = 'output window, operand 0, single buffered']
    %8 = vsyncpa [#allocation3], 0
    %9 = vsyncpa [#allocation6], 0
    %10 = vsyncpa [#allocation4], 0
    // Predicated region
    $region2: #{_ensemble_predict.1} parent=1 // pred_check
      _
    $region3: #{_ensemble_predict.1} parent=1 // pred_check_branch
      %12 = sbr.rel (0) target = $region5
    $region4: #{_ensemble_predict.1} parent=1 // pred_region
      %s14 = ssub.s32 128, 128
      %15 = vsyncadd [#allocation3], %s14
      %s17 = sshll.u32 [#allocation2], 4
      %s18 = int_to_ptr.vmem [resolvable:$true] %s17
      %20 = dma.hbm_to_vmem [thread:$0]  %s0, 128, %s18, [#allocation3]
    $region5: #{_ensemble_predict.1} parent=1 // pred_fallthru
      _
    // Predicated region
    $region6: #{_ensemble_predict.1} parent=1 // pred_check
      _
    $region7: #{_ensemble_predict.1} parent=1 // pred_check_branch
      %22 = sbr.rel (0) target = $region9
    $region8: #{_ensemble_predict.1} parent=1 // pred_region
      %s24 = ssub.s32 1280, 1280
      %25 = vsyncadd [#allocation6], %s24
      %s26 = sshll.u32 [#allocation5], 4
      %s27 = int_to_ptr.vmem [resolvable:$true] %s26
      %32 = dma.hbm_to_vmem [thread:$0]  %s1, 1280, %s27, [#allocation6], 256, 256, 16
    $region9: #{_ensemble_predict.1} parent=1 // pred_fallthru
      _
    // Predicated region
    $region10: #{_ensemble_predict.1} parent=1 // pred_check
      _
    $region11: #{_ensemble_predict.1} parent=1 // pred_check_branch
      %34 = sbr.rel (0) target = $region13
    $region12: #{_ensemble_predict.1} parent=1 // pred_region
      %s36 = ssub.s32 2688, 2688
      %37 = vsyncadd [#allocation6], %s36
      %s38 = sshll.u32 [#allocation7], 4
      %s39 = int_to_ptr.vmem [resolvable:$true] %s38
      %44 = dma.hbm_to_vmem [thread:$0]  %s2, 2688, %s39, [#allocation6], 128, 128, 8
    $region13: #{_ensemble_predict.1} parent=1 // pred_fallthru
      _
    // Predicated region
    $region14: #{_ensemble_predict.1} parent=1 // pred_check
      _
    $region15: #{_ensemble_predict.1} parent=1 // pred_check_branch
      %46 = sbr.rel (0) target = $region17
    $region16: #{_ensemble_predict.1} parent=1 // pred_region
      %47 = dma.done [#allocation3], 128
    $region17: #{_ensemble_predict.1} parent=1 // pred_fallthru
      _
    // Predicated region
    $region18: #{_ensemble_predict.1} parent=1 // pred_check
      _
    $region19: #{_ensemble_predict.1} parent=1 // pred_check_branch
      %49 = sbr.rel (0) target = $region21
    $region20: #{_ensemble_predict.1} parent=1 // pred_region
      %50 = dma.done [#allocation6], 1280
    $region21: #{_ensemble_predict.1} parent=1 // pred_fallthru
      _
    // Predicated region
    $region22: #{_ensemble_predict.1} parent=1 // pred_check
      _
    $region23: #{_ensemble_predict.1} parent=1 // pred_check_branch
      %52 = sbr.rel (0) target = $region25
    $region24: #{_ensemble_predict.1} parent=1 // pred_region
      %53 = dma.done [#allocation6], 2688
    $region25: #{_ensemble_predict.1} parent=1 // pred_fallthru
      _
    %v54 = vld [vmem:[#allocation2] sm:$0xff]
    %v55 = vld [vmem:[#allocation5] sm:$0xff]
    %v56 = vld [vmem:[#allocation5 + $0x8] sm:$0xff]
    %v57 = vld [vmem:[#allocation5 + $0x10] sm:$0xff]
    %v58 = vld [vmem:[#allocation5 + $0x18] sm:$0xff]
    %v59 = vld [vmem:[#allocation5 + $0x20] sm:$0xff]
    %v60 = vld [vmem:[#allocation5 + $0x28] sm:$0xff]
    %v61 = vld [vmem:[#allocation5 + $0x30] sm:$0xff]
    %v62 = vld [vmem:[#allocation5 + $0x38] sm:$0xff]
    %s63 = scalar_lea.vmem [#allocation5], 64
    %v64 = vld [vmem:[%s63] ss:$8 sm:$0x3]
    %v66 = vlaneseq
    %v67 = vshrl.u32 %v66, 7
    %v68 = vsub.s32 0, %v67
    %v69 = vrot.slane %v64, %v68
    %v70 = vlaneseq
    %v71 = vshrl.u32 %v70, 7
    %v72 = vsub.s32 1, %v71
    %v73 = vrot.slane %v64, %v72
    %vm76 = vcmask 261120
    %v78 = vsel %vm76, %v54, 0
    %80 = vmatprep.subr.mxu0 0.0
    %81 = vmatpush1.msra.mxu0 0.0
    %82 = vmatprep.subr.mxu0 0.0
    %83 = vmatpush1.msra.mxu0 0.0
    %84 = vmatprep.subr.mxu0 0.0
    %85 = vmatpush1.msra.mxu0 0.0
    %86 = vmatprep.subr.mxu0 0.0
    %87 = vmatpush1.msra.mxu0 0.0
    %88 = vmatprep.subr.mxu0 0.0
    %89 = vmatpush1.msra.mxu0 0.0
    %90 = vmatprep.subr.mxu0 0.0
    %91 = vmatpush1.msra.mxu0 0.0
    %92 = vmatprep.subr.mxu0 0.0
    %93 = vmatpush1.msra.mxu0 0.0
    %94 = vmatprep.subr.mxu0 0.0
    %95 = vmatpush1.msra.mxu0 0.0
    %96 = vmatprep.subr.mxu0 0.0
    %97 = vmatpush1.msra.mxu0 0.0
    %98 = vmatprep.subr.mxu0 0.0
    %99 = vmatpush1.msra.mxu0 0.0
    %100 = vmatprep.subr.mxu0 0.0
    %101 = vmatpush1.msra.mxu0 0.0
    %102 = vmatprep.subr.mxu0 0.0
    %103 = vmatpush1.msra.mxu0 0.0
    %104 = vmatprep.subr.mxu0 %v62
    %105 = vmatpush1.msra.mxu0 %v61
    %106 = vmatprep.subr.mxu0 %v60
    %107 = vmatpush1.msra.mxu0 %v59
    %108 = vmatprep.subr.mxu0 %v58
    %109 = vmatpush1.msra.mxu0 %v57
    %110 = vmatprep.subr.mxu0 %v56
    %111 = vmatpush1.msra.mxu0 %v55
    %112 = vmatprep.subr.mxu0 0.0
    %113 = vmatpush2.msra.mxu0 0.0
    %114 = vmatprep.subr.mxu0 0.0
    %115 = vmatpush2.msra.mxu0 0.0
    %116 = vmatprep.subr.mxu0 0.0
    %117 = vmatpush2.msra.mxu0 0.0
    %118 = vmatprep.subr.mxu0 0.0
    %119 = vmatpush2.msra.mxu0 0.0
    %120 = vmatprep.subr.mxu0 0.0
    %121 = vmatpush2.msra.mxu0 0.0
    %122 = vmatprep.subr.mxu0 0.0
    %123 = vmatpush2.msra.mxu0 0.0
    %124 = vmatprep.subr.mxu0 0.0
    %125 = vmatpush2.msra.mxu0 0.0
    %126 = vmatprep.subr.mxu0 0.0
    %127 = vmatpush2.msra.mxu0 0.0
    %128 = vmatprep.subr.mxu0 0.0
    %129 = vmatpush2.msra.mxu0 0.0
    %130 = vmatprep.subr.mxu0 0.0
    %131 = vmatpush2.msra.mxu0 0.0
    %132 = vmatprep.subr.mxu0 0.0
    %133 = vmatpush2.msra.mxu0 0.0
    %134 = vmatprep.subr.mxu0 0.0
    %135 = vmatpush2.msra.mxu0 0.0
    %136 = vmatprep.subr.mxu0 0.0
    %137 = vmatpush2.msra.mxu0 0.0
    %138 = vmatprep.subr.mxu0 0.0
    %139 = vmatpush2.msra.mxu0 0.0
    %140 = vmatprep.subr.mxu0 0.0
    %141 = vmatpush2.msra.mxu0 0.0
    %142 = vmatprep.subr.mxu0 0.0
    %143 = vmatpush2.msra.mxu0 0.0
    %144 = vmatprep.mubr.f32.mxu0 0.0
    %145 = vmatmul.mubr.f32.gmra.mxu0 %v78
    %v146 = vpop.f32.mrf.mxu0
    %v147 = vadd.f32 %v69, %v146
    %v148 = vpop.f32.mrf.mxu0
    %v149 = vadd.f32 %v73, %v148
    %150 = vdwg.mxu0
    %v151 = vmax.f32 %v147, 0.0
    %v152 = vmax.f32 %v149, 0.0
    %v153 = vld [vmem:[#allocation7] sm:$0xff]
    %v154 = vld [vmem:[#allocation7 + $0x8] sm:$0xff]
    %v155 = vld [vmem:[#allocation7 + $0x10] sm:$0xff]
    %v156 = vld [vmem:[#allocation7 + $0x18] sm:$0xff]
    %v157 = vld [vmem:[#allocation7 + $0x20] sm:$0xff]
    %v158 = vld [vmem:[#allocation7 + $0x28] sm:$0xff]
    %v159 = vld [vmem:[#allocation7 + $0x30] sm:$0xff]
    %v160 = vld [vmem:[#allocation7 + $0x38] sm:$0xff]
    %v161 = vld [vmem:[#allocation7 + $0x40] sm:$0xff]
    %v162 = vld [vmem:[#allocation7 + $0x48] sm:$0xff]
    %v163 = vld [vmem:[#allocation7 + $0x50] sm:$0xff]
    %v164 = vld [vmem:[#allocation7 + $0x58] sm:$0xff]
    %v165 = vld [vmem:[#allocation7 + $0x60] sm:$0xff]
    %v166 = vld [vmem:[#allocation7 + $0x68] sm:$0xff]
    %v167 = vld [vmem:[#allocation7 + $0x70] sm:$0xff]
    %v168 = vld [vmem:[#allocation7 + $0x78] sm:$0xff]
    %v169 = vld [vmem:[#allocation7 + $0x80] sm:$0xff]
    %v170 = vld [vmem:[#allocation7 + $0x88] sm:$0xff]
    %v171 = vld [vmem:[#allocation7 + $0x90] sm:$0xff]
    %v172 = vld [vmem:[#allocation7 + $0x98] sm:$0xff]
    %v173 = vld [vmem:[#allocation7 + $0xa0] sm:$0x1]
    %v174 = vlaneseq
    %v175 = vshrl.u32 %v174, 7
    %v176 = vsub.s32 0, %v175
    %v177 = vrot.slane %v173, %v176
    %v179 = vsel %vm76, %v152, 0
    %181 = vmatprep.subr.mxu0 0.0
    %182 = vmatpush1.msra.mxu0 %v168
    %183 = vmatprep.subr.mxu0 0.0
    %184 = vmatpush1.msra.mxu0 %v167
    %185 = vmatprep.subr.mxu0 0.0
    %186 = vmatpush1.msra.mxu0 %v166
    %187 = vmatprep.subr.mxu0 0.0
    %188 = vmatpush1.msra.mxu0 %v165
    %189 = vmatprep.subr.mxu0 0.0
    %190 = vmatpush1.msra.mxu0 %v164
    %191 = vmatprep.subr.mxu0 0.0
    %192 = vmatpush1.msra.mxu0 %v163
    %193 = vmatprep.subr.mxu0 0.0
    %194 = vmatpush1.msra.mxu0 %v162
    %195 = vmatprep.subr.mxu0 0.0
    %196 = vmatpush1.msra.mxu0 %v161
    %197 = vmatprep.subr.mxu0 0.0
    %198 = vmatpush1.msra.mxu0 %v160
    %199 = vmatprep.subr.mxu0 0.0
    %200 = vmatpush1.msra.mxu0 %v159
    %201 = vmatprep.subr.mxu0 0.0
    %202 = vmatpush1.msra.mxu0 %v158
    %203 = vmatprep.subr.mxu0 0.0
    %204 = vmatpush1.msra.mxu0 %v157
    %205 = vmatprep.subr.mxu0 0.0
    %206 = vmatpush1.msra.mxu0 %v156
    %207 = vmatprep.subr.mxu0 0.0
    %208 = vmatpush1.msra.mxu0 %v155
    %209 = vmatprep.subr.mxu0 0.0
    %210 = vmatpush1.msra.mxu0 %v154
    %211 = vmatprep.subr.mxu0 0.0
    %212 = vmatpush1.msra.mxu0 %v153
    %213 = vmatprep.subr.mxu0 0.0
    %214 = vmatpush2.msra.mxu0 0.0
    %215 = vmatprep.subr.mxu0 0.0
    %216 = vmatpush2.msra.mxu0 0.0
    %217 = vmatprep.subr.mxu0 0.0
    %218 = vmatpush2.msra.mxu0 0.0
    %219 = vmatprep.subr.mxu0 0.0
    %220 = vmatpush2.msra.mxu0 0.0
    %221 = vmatprep.subr.mxu0 0.0
    %222 = vmatpush2.msra.mxu0 0.0
    %223 = vmatprep.subr.mxu0 0.0
    %224 = vmatpush2.msra.mxu0 0.0
    %225 = vmatprep.subr.mxu0 0.0
    %226 = vmatpush2.msra.mxu0 0.0
    %227 = vmatprep.subr.mxu0 0.0
    %228 = vmatpush2.msra.mxu0 0.0
    %229 = vmatprep.subr.mxu0 0.0
    %230 = vmatpush2.msra.mxu0 0.0
    %231 = vmatprep.subr.mxu0 0.0
    %232 = vmatpush2.msra.mxu0 0.0
    %233 = vmatprep.subr.mxu0 0.0
    %234 = vmatpush2.msra.mxu0 0.0
    %235 = vmatprep.subr.mxu0 0.0
    %236 = vmatpush2.msra.mxu0 0.0
    %237 = vmatprep.subr.mxu0 0.0
    %238 = vmatpush2.msra.mxu0 %v172
    %239 = vmatprep.subr.mxu0 0.0
    %240 = vmatpush2.msra.mxu0 %v171
    %241 = vmatprep.subr.mxu0 0.0
    %242 = vmatpush2.msra.mxu0 %v170
    %243 = vmatprep.subr.mxu0 0.0
    %244 = vmatpush2.msra.mxu0 %v169
    %245 = vmatprep.mubr.f32.mxu0 %v179
    %246 = vmatmul.mubr.f32.gmra.mxu0 %v151
    %v247 = vpop.f32.mrf.mxu0
    %v248 = vadd.f32 %v177, %v247
    %v249 = vpop.f32.mrf.mxu0
    %250 = vdwg.mxu0
    %251 = vst [vmem:[#allocation8] sm:$0xff] %v248
    // Predicated region
    $region26: #{_ensemble_predict.1} parent=1 // pred_check
      _
    $region27: #{_ensemble_predict.1} parent=1 // pred_check_branch
      %253 = sbr.rel (0) target = $region29
    $region28: #{_ensemble_predict.1} parent=1 // pred_region
      %s255 = ssub.s32 128, 128
      %256 = vsyncadd [#allocation4], %s255
      %s258 = sshll.u32 [#allocation8], 4
      %s259 = int_to_ptr.vmem [resolvable:$true] %s258
      %261 = dma.vmem_to_hbm [thread:$0]  %s259, 128, %s3, [#allocation4]
    $region29: #{_ensemble_predict.1} parent=1 // pred_fallthru
      _
    // Predicated region
    $region30: #{_ensemble_predict.1} parent=1 // pred_check
      _
    $region31: #{_ensemble_predict.1} parent=1 // pred_check_branch
      %263 = sbr.rel (0) target = $region33
    $region32: #{_ensemble_predict.1} parent=1 // pred_region
      %264 = dma.done [#allocation4], 128
    $region33: #{_ensemble_predict.1} parent=1 // pred_fallthru
      _
    %265 = vsyncpa [#allocation3], 1
    %266 = vsyncpa [#allocation6], 1
    %267 = vsyncpa [#allocation4], 1

</llo_original>
